<compile_context>
chip_gen: v5e
topology: v5e:2x2
jax: 0.10.0
libtpu: 0.0.40
codegen_flags: <defaults>
</compile_context>

<pallas_src>
import functools

import jax
import jax.numpy as jnp
from jax.experimental import pallas as pl
from jax.experimental.pallas import tpu as pltpu


def _round_up(x, m):
    return ((x + m - 1) // m) * m


def _mlp_kernel(x_ref, w1t_ref, b1_ref, w2t_ref, b2_ref, o_ref):
    """out = relu(x @ W1t + b1) @ W2t + b2   (all matmuls accumulate in f32)."""
    x = x_ref[...]
    h = jnp.dot(x, w1t_ref[...], preferred_element_type=jnp.float32) + b1_ref[...]
    h = jnp.maximum(h, 0.0)                      # ReLU on the VPU (f32)
    out = jnp.dot(h.astype(w2t_ref.dtype), w2t_ref[...],
                  preferred_element_type=jnp.float32) + b2_ref[...]
    o_ref[...] = out.astype(o_ref.dtype)


@functools.partial(jax.jit, static_argnames=("block_b",))
def model_multilayer_forward(story, w1, b1, w2, b2, *, block_b=512):
    """story: (B, ...) -> flattened to (B, dim_feature_tracklet), like story.view(B, -1).

    w1: (hidden, F_in), b1: (hidden,), w2: (F_out, hidden), b2: (F_out,)  [PyTorch layout]
    """
    dim_batch = story.shape[0]
    x = story.reshape(dim_batch, -1)                 # glue reshape in plain JAX
    f_in = x.shape[1]
    hidden = w1.shape[0]
    f_out = w2.shape[0]

    # --- one-time layout prep in the wrapper (negligible XLA ops, not per grid step) ---
    hid_pad = _round_up(max(hidden, 128), 128)       # 60 -> 128  (lane-dense hidden)
    out_pad = _round_up(max(f_out, 128), 128)        # 16 -> 128  (lane-dense output store)

    w1t = jnp.zeros((f_in, hid_pad), w1.dtype).at[:, :hidden].set(w1.T)
    b1p = jnp.zeros((1, hid_pad), jnp.float32).at[:, :hidden].set(b1.astype(jnp.float32))
    w2t = jnp.zeros((hid_pad, out_pad), w2.dtype).at[:hidden, :f_out].set(w2.T)
    b2p = jnp.zeros((1, out_pad), jnp.float32).at[:, :f_out].set(b2.astype(jnp.float32))

    # --- batch tiling: TB multiple of 8, capped so double-buffered x/out tiles fit
    #     comfortably in v7x's 64 MiB VMEM (512 rows * ~1.5 KB * 2 buffers << limit) ---
    tb = min(block_b, _round_up(dim_batch, 8))
    b_pad = _round_up(dim_batch, tb)
    if b_pad != dim_batch:
        x = jnp.pad(x, ((0, b_pad - dim_batch), (0, 0)))

    out_padded = pl.pallas_call(
        _mlp_kernel,
        out_shape=jax.ShapeDtypeStruct((b_pad, out_pad), x.dtype),
        grid_spec=pl.GridSpec(
            grid=(b_pad // tb,),
            in_specs=[
                pl.BlockSpec((tb, f_in), lambda i: (i, 0)),         # x: tiled over batch
                pl.BlockSpec((f_in, hid_pad), lambda i: (0, 0)),    # W1^T: resident
                pl.BlockSpec((1, hid_pad), lambda i: (0, 0)),       # b1:   resident
                pl.BlockSpec((hid_pad, out_pad), lambda i: (0, 0)), # W2^T: resident
                pl.BlockSpec((1, out_pad), lambda i: (0, 0)),       # b2:   resident
            ],
            out_specs=pl.BlockSpec((tb, out_pad), lambda i: (i, 0)),
        ),
        compiler_params=pltpu.CompilerParams(
            dimension_semantics=("parallel",)),   # batch tiles are independent (v7x 2 TCs)
    )(x, w1t, b1p, w2t, b2p)

    return out_padded[:dim_batch, :f_out]


def xavier_uniform(key, shape, dtype=jnp.float32):
    """torch.nn.init.xavier_uniform_ for a (fan_out, fan_in) Linear weight."""
    fan_out, fan_in = shape
    limit = (6.0 / (fan_in + fan_out)) ** 0.5
    return jax.random.uniform(key, shape, dtype, minval=-limit, maxval=limit)


if __name__ == "__main__":
    # settings: dim_feature_tracklet = 32 (story of shape (B, 8, 4) flattened),
    #           dim_feature_future = 16, hidden = 60 (fixed by the module).
    dim_feature_tracklet = 32
    dim_feature_future = 16
    hidden = 60
    batch = 8

    key = jax.random.PRNGKey(0)
    k_story, k_w1, k_w2 = jax.random.split(key, 3)

    story = jax.random.normal(k_story, (batch, 8, 4), dtype=jnp.float32)

    w1 = xavier_uniform(k_w1, (hidden, dim_feature_tracklet))
    b1 = jnp.zeros((hidden,), jnp.float32)
    w2 = xavier_uniform(k_w2, (dim_feature_future, hidden))
    b2 = jnp.zeros((dim_feature_future,), jnp.float32)

    out = model_multilayer_forward(story, w1, b1, w2, b2)
    out = jax.block_until_ready(out)

    # Reference check in plain JAX.
    x_flat = story.reshape(batch, -1)
    ref = jnp.maximum(x_flat @ w1.T + b1, 0.0) @ w2.T + b2
    assert out.shape == (batch, dim_feature_future)
    assert jnp.allclose(out, ref, atol=1e-5, rtol=1e-5)

    print("KERNEL_OK")
</pallas_src>

<mosaic_0001>
module attributes {stable_mosaic.version = 11 : i64} {
  func.func @_mlp_kernel(%arg0: i32, %arg1: memref<8x32xf32, #tpu.memory_space<vmem>>, %arg2: memref<32x128xf32, #tpu.memory_space<vmem>>, %arg3: memref<1x128xf32, #tpu.memory_space<vmem>>, %arg4: memref<128x128xf32, #tpu.memory_space<vmem>>, %arg5: memref<1x128xf32, #tpu.memory_space<vmem>>, %arg6: memref<8x128xf32, #tpu.memory_space<vmem>>) attributes {dimension_semantics = [#tpu.dimension_semantics<parallel>], iteration_bounds = array<i64: 1>, scalar_prefetch = 0 : i64, scratch_operands = 0 : i64, tpu.core_type = #tpu.core_type<tc>, window_params = [{transform_indices = @transform_0, window_bounds = array<i64: 8, 32>}, {pipeline_mode = #tpu.pipeline_mode<synchronous>, transform_indices = @transform_1, window_bounds = array<i64: 32, 128>}, {pipeline_mode = #tpu.pipeline_mode<synchronous>, transform_indices = @transform_2, window_bounds = array<i64: 1, 128>}, {pipeline_mode = #tpu.pipeline_mode<synchronous>, transform_indices = @transform_3, window_bounds = array<i64: 128, 128>}, {pipeline_mode = #tpu.pipeline_mode<synchronous>, transform_indices = @transform_4, window_bounds = array<i64: 1, 128>}, {transform_indices = @transform_5, window_bounds = array<i64: 8, 128>}]} {
    %c0 = arith.constant 0 : index
    %c0_0 = arith.constant 0 : index
    %0 = vector.load %arg1[%c0, %c0_0] : memref<8x32xf32, #tpu.memory_space<vmem>>, vector<8x32xf32>
    %c0_1 = arith.constant 0 : index
    %c0_2 = arith.constant 0 : index
    %1 = vector.load %arg2[%c0_1, %c0_2] : memref<32x128xf32, #tpu.memory_space<vmem>>, vector<32x128xf32>
    %cst = arith.constant dense<0.000000e+00> : vector<8x128xf32>
    %2 = tpu.matmul %0, %1, %cst {dimension_numbers = #tpu.dot_dimension_numbers<[1], [0], [0], [1], [0, 0, 1, 1], [], []>} : vector<8x32xf32>, vector<32x128xf32>, vector<8x128xf32> -> vector<8x128xf32>
    %c0_3 = arith.constant 0 : index
    %c0_4 = arith.constant 0 : index
    %3 = vector.load %arg3[%c0_3, %c0_4] : memref<1x128xf32, #tpu.memory_space<vmem>>, vector<1x128xf32>
    %4 = vector.broadcast %3 : vector<1x128xf32> to vector<8x128xf32>
    %5 = arith.addf %2, %4 : vector<8x128xf32>
    %cst_5 = arith.constant 0.000000e+00 : f32
    %6 = vector.broadcast %cst_5 : f32 to vector<8x128xf32>
    %7 = arith.maximumf %5, %6 : vector<8x128xf32>
    %c0_6 = arith.constant 0 : index
    %c0_7 = arith.constant 0 : index
    %8 = vector.load %arg4[%c0_6, %c0_7] : memref<128x128xf32, #tpu.memory_space<vmem>>, vector<128x128xf32>
    %cst_8 = arith.constant dense<0.000000e+00> : vector<8x128xf32>
    %9 = tpu.matmul %7, %8, %cst_8 {dimension_numbers = #tpu.dot_dimension_numbers<[1], [0], [0], [1], [0, 0, 1, 1], [], []>} : vector<8x128xf32>, vector<128x128xf32>, vector<8x128xf32> -> vector<8x128xf32>
    %c0_9 = arith.constant 0 : index
    %c0_10 = arith.constant 0 : index
    %10 = vector.load %arg5[%c0_9, %c0_10] : memref<1x128xf32, #tpu.memory_space<vmem>>, vector<1x128xf32>
    %11 = vector.broadcast %10 : vector<1x128xf32> to vector<8x128xf32>
    %12 = arith.addf %9, %11 : vector<8x128xf32>
    %c0_11 = arith.constant 0 : index
    %c0_12 = arith.constant 0 : index
    %13 = vector.load %arg6[%c0_11, %c0_12] : memref<8x128xf32, #tpu.memory_space<vmem>>, vector<8x128xf32>
    tpu.vector_store %arg6[%c0_11, %c0_12], %12 {strides = array<i32>} : memref<8x128xf32, #tpu.memory_space<vmem>>, vector<8x128xf32>,
    return
  }
  func.func @transform_0(%arg0: i32) -> (i32, i32) {
    %c0_i32 = arith.constant 0 : i32
    %c0_i32_0 = arith.constant 0 : i32
    return %arg0, %c0_i32 : i32, i32
  }
  func.func @transform_1(%arg0: i32) -> (i32, i32) {
    %c0_i32 = arith.constant 0 : i32
    %c0_i32_0 = arith.constant 0 : i32
    %c0_i32_1 = arith.constant 0 : i32
    return %c0_i32, %c0_i32_0 : i32, i32
  }
  func.func @transform_2(%arg0: i32) -> (i32, i32) {
    %c0_i32 = arith.constant 0 : i32
    %c0_i32_0 = arith.constant 0 : i32
    %c0_i32_1 = arith.constant 0 : i32
    return %c0_i32, %c0_i32_0 : i32, i32
  }
  func.func @transform_3(%arg0: i32) -> (i32, i32) {
    %c0_i32 = arith.constant 0 : i32
    %c0_i32_0 = arith.constant 0 : i32
    %c0_i32_1 = arith.constant 0 : i32
    return %c0_i32, %c0_i32_0 : i32, i32
  }
  func.func @transform_4(%arg0: i32) -> (i32, i32) {
    %c0_i32 = arith.constant 0 : i32
    %c0_i32_0 = arith.constant 0 : i32
    %c0_i32_1 = arith.constant 0 : i32
    return %c0_i32, %c0_i32_0 : i32, i32
  }
  func.func @transform_5(%arg0: i32) -> (i32, i32) {
    %c0_i32 = arith.constant 0 : i32
    %c0_i32_0 = arith.constant 0 : i32
    return %arg0, %c0_i32 : i32, i32
  }
}

</mosaic_0001>

<llo_original>
// kernel: model_multilayer_forward.1
$region0: #{model_multilayer_forward.1}
  #allocation0 [shape = 'u32[]', space=smem, size = 0x4, offset = 0x4, fixed_abs, tag = 'smem constant byte address 0x4 - core index']
  #allocation1 [shape = 'u32[72,128]{1,0:T(1,128)}', space=vmem, size = 0x9000, scoped, tag = 'internal scratch']
  %s0 = inlined_call_operand.vmem [shape: f32[8,32], index: 0, kind: input, shape index: {}]
  %s1 = inlined_call_operand.vmem [shape: f32[32,128], index: 1, kind: input, shape index: {}]
  %s2 = inlined_call_operand.vmem [shape: f32[1,128], index: 2, kind: input, shape index: {}]
  %s3 = inlined_call_operand.vmem [shape: f32[128,128], index: 3, kind: input, shape index: {}]
  %s4 = inlined_call_operand.vmem [shape: f32[1,128], index: 4, kind: input, shape index: {}]
  %s5 = inlined_call_operand.hbm [shape: f32[8,128], index: 5, kind: output, shape index: {}]
  %s6 = sld [smem:[#allocation0]]
  $region30: #{model_multilayer_forward.1} parent=0
    _
  %s8 = ssub.s32 1, %s6
  %s9 = scalar_select 0, %s8, %s6
  $region1: #{model_multilayer_forward.1} parent=0
    #allocation2 [shape = 'u8[4096]{0}', space=vmem, size = 0x1000, scoped, tag = 'output window, operand 0, single buffered']
    #allocation3 [shape = 's32[1]{0}', space=sflag, size = 0x4, scoped, tag = 'scoped memory for model_multilayer_forward.1']
    %10 = vsyncpa [#allocation3], 0
    // Predicated region
    $region2: #{model_multilayer_forward.1} parent=1 // pred_check
      _
    $region3: #{model_multilayer_forward.1} parent=1 // pred_check_branch
      %12 = sbr.rel (0) target = $region5
    $region4: #{model_multilayer_forward.1} parent=1 // pred_region
      _
    $region5: #{model_multilayer_forward.1} parent=1 // pred_fallthru
      _
    // Predicated region
    $region6: #{model_multilayer_forward.1} parent=1 // pred_check
      _
    $region7: #{model_multilayer_forward.1} parent=1 // pred_check_branch
      %14 = sbr.rel (0) target = $region9
    $region8: #{model_multilayer_forward.1} parent=1 // pred_region
      _
    $region9: #{model_multilayer_forward.1} parent=1 // pred_fallthru
      _
    // Predicated region
    $region10: #{model_multilayer_forward.1} parent=1 // pred_check
      _
    $region11: #{model_multilayer_forward.1} parent=1 // pred_check_branch
      %16 = sbr.rel (0) target = $region13
    $region12: #{model_multilayer_forward.1} parent=1 // pred_region
      _
    $region13: #{model_multilayer_forward.1} parent=1 // pred_fallthru
      _
    // Predicated region
    $region14: #{model_multilayer_forward.1} parent=1 // pred_check
      _
    $region15: #{model_multilayer_forward.1} parent=1 // pred_check_branch
      %18 = sbr.rel (0) target = $region17
    $region16: #{model_multilayer_forward.1} parent=1 // pred_region
      _
    $region17: #{model_multilayer_forward.1} parent=1 // pred_fallthru
      _
    // Predicated region
    $region18: #{model_multilayer_forward.1} parent=1 // pred_check
      _
    $region19: #{model_multilayer_forward.1} parent=1 // pred_check_branch
      %20 = sbr.rel (0) target = $region21
    $region20: #{model_multilayer_forward.1} parent=1 // pred_region
      _
    $region21: #{model_multilayer_forward.1} parent=1 // pred_fallthru
      _
    %v21 = vld [vmem:[%s0] sm:$0xff]
    %v22 = vld [vmem:[%s1] sm:$0xff]
    %v23 = vld [vmem:[%s1 + $0x8] sm:$0xff]
    %v24 = vld [vmem:[%s1 + $0x10] sm:$0xff]
    %v25 = vld [vmem:[%s1 + $0x18] sm:$0xff]
    %v26 = vld [vmem:[%s2] sm:$0x1]
    %v28 = vperm.slane %v26, 0
    %vm30 = vcmask 261120
    %v32 = vsel %vm30, %v21, 0
    %34 = vmatpush.msra.mxu0 0.0
    %35 = vmatpush.msra.mxu0 0.0
    %36 = vmatpush.msra.mxu0 0.0
    %37 = vmatpush.msra.mxu0 0.0
    %38 = vmatpush.msra.mxu0 0.0
    %39 = vmatpush.msra.mxu0 0.0
    %40 = vmatpush.msra.mxu0 0.0
    %41 = vmatpush.msra.mxu0 0.0
    %42 = vmatpush.msra.mxu0 0.0
    %43 = vmatpush.msra.mxu0 0.0
    %44 = vmatpush.msra.mxu0 0.0
    %45 = vmatpush.msra.mxu0 0.0
    %46 = vmatpush.msra.mxu0 %v25
    %47 = vmatpush.msra.mxu0 %v24
    %48 = vmatpush.msra.mxu0 %v23
    %49 = vmatpush.msra.mxu0 %v22
    %50 = vmatmul.f32.gmra.mxu0 %v32
    %v51 = vpop.f32.mrf.mxu0
    %v52 = vadd.f32 %v28, %v51
    %53 = vdwg.mxu0
    %v54 = vmax.f32 %v52, 0.0
    %v55 = vld [vmem:[%s3] sm:$0xff]
    %v56 = vld [vmem:[%s3 + $0x8] sm:$0xff]
    %v57 = vld [vmem:[%s3 + $0x10] sm:$0xff]
    %v58 = vld [vmem:[%s3 + $0x18] sm:$0xff]
    %v59 = vld [vmem:[%s3 + $0x20] sm:$0xff]
    %v60 = vld [vmem:[%s3 + $0x28] sm:$0xff]
    %v61 = vld [vmem:[%s3 + $0x30] sm:$0xff]
    %v62 = vld [vmem:[%s3 + $0x38] sm:$0xff]
    %v63 = vld [vmem:[%s3 + $0x40] sm:$0xff]
    %v64 = vld [vmem:[%s3 + $0x48] sm:$0xff]
    %v65 = vld [vmem:[%s3 + $0x50] sm:$0xff]
    %v66 = vld [vmem:[%s3 + $0x58] sm:$0xff]
    %v67 = vld [vmem:[%s3 + $0x60] sm:$0xff]
    %v68 = vld [vmem:[%s3 + $0x68] sm:$0xff]
    %v69 = vld [vmem:[%s3 + $0x70] sm:$0xff]
    %v70 = vld [vmem:[%s3 + $0x78] sm:$0xff]
    %v71 = vld [vmem:[%s4] sm:$0x1]
    %v73 = vperm.slane %v71, 0
    %75 = vmatpush.msra.mxu0 %v70
    %76 = vmatpush.msra.mxu0 %v69
    %77 = vmatpush.msra.mxu0 %v68
    %78 = vmatpush.msra.mxu0 %v67
    %79 = vmatpush.msra.mxu0 %v66
    %80 = vmatpush.msra.mxu0 %v65
    %81 = vmatpush.msra.mxu0 %v64
    %82 = vmatpush.msra.mxu0 %v63
    %83 = vmatpush.msra.mxu0 %v62
    %84 = vmatpush.msra.mxu0 %v61
    %85 = vmatpush.msra.mxu0 %v60
    %86 = vmatpush.msra.mxu0 %v59
    %87 = vmatpush.msra.mxu0 %v58
    %88 = vmatpush.msra.mxu0 %v57
    %89 = vmatpush.msra.mxu0 %v56
    %90 = vmatpush.msra.mxu0 %v55
    %91 = vmatmul.f32.gmra.mxu0 %v54
    %v92 = vpop.f32.mrf.mxu0
    %v93 = vadd.f32 %v73, %v92
    %94 = vdwg.mxu0
    %95 = vst [vmem:[#allocation2] sm:$0xff] %v93
    // Predicated region
    $region22: #{model_multilayer_forward.1} parent=1 // pred_check
      _
    $region23: #{model_multilayer_forward.1} parent=1 // pred_check_branch
      %97 = sbr.rel (0) target = $region25
    $region24: #{model_multilayer_forward.1} parent=1 // pred_region
      %99 = vsyncadd [#allocation3], 0
      %s101 = sshll.u32 [#allocation2], 4
      %s102 = int_to_ptr.vmem [resolvable:$true] %s101
      %s103 = sshll.u32 %s5, 4
      %s104 = int_to_ptr.hbm [resolvable:$true] %s103
      %106 = dma.vmem_to_hbm [thread:$0]  %s102, 128, %s104, [#allocation3]
    $region25: #{model_multilayer_forward.1} parent=1 // pred_fallthru
      _
    // Predicated region
    $region26: #{model_multilayer_forward.1} parent=1 // pred_check
      _
    $region27: #{model_multilayer_forward.1} parent=1 // pred_check_branch
      %108 = sbr.rel (0) target = $region29
    $region28: #{model_multilayer_forward.1} parent=1 // pred_region
      %110 = dma.done [#allocation3], 128
    $region29: #{model_multilayer_forward.1} parent=1 // pred_fallthru
      _
    %111 = vsyncpa [#allocation3], 1

</llo_original>
